<compile_context>
chip_gen: v5e
topology: v5e:2x2
jax: 0.10.0
libtpu: 0.0.40
codegen_flags: <defaults>
</compile_context>

<pallas_src>
import jax
import jax.numpy as jnp
from jax.experimental import pallas as pl
from jax.experimental.pallas import tpu as pltpu

LANE = 128


def _round_up(n, m):
    return ((n + m - 1) // m) * m


def mlp_kernel(x_ref, w1_ref, b1_ref, w2_ref, b2_ref, o_ref):
    # fc1: bf16 [TB, INp] @ bf16 [INp, H] -> f32 accumulate on the MXU.
    h = jnp.dot(x_ref[...], w1_ref[...], preferred_element_type=jnp.float32)
    # Bias + ReLU in f32 (VPU), then feed fc2's LHS to the MXU in bf16.
    h = jnp.maximum(h + b1_ref[...], 0.0).astype(jnp.bfloat16)
    # fc2: bf16 [TB, H] @ bf16 [H, OUTp] -> f32 accumulate.
    o = jnp.dot(h, w2_ref[...], preferred_element_type=jnp.float32)
    # Lean epilogue: bias add, cast, lane-dense store (OUTp is a multiple of 128).
    o_ref[...] = (o + b2_ref[...]).astype(o_ref.dtype)


def mlp_forward(x, w1, b1, w2, b2, *, tile_b=256):
    """x: [B, IN], w1: [IN, H], b1: [1, H], w2: [H, OUT], b2: [1, OUT] (f32).

    Returns f32 [B, OUT]; matmuls run in bf16 with f32 accumulation.
    """
    B, IN = x.shape
    H = w1.shape[1]
    OUT = w2.shape[1]

    # Lane-pad the feature dims to 128 so loads/stores are lane-dense.
    IN_p = _round_up(max(IN, LANE), LANE)
    OUT_p = _round_up(max(OUT, LANE), LANE)

    # Batch tile: multiple of 8 sublanes, capped by tile_b; pad B up to it.
    tb = min(_round_up(tile_b, 8), _round_up(B, 8))
    B_p = _round_up(B, tb)

    f32 = jnp.float32
    bf16 = jnp.bfloat16

    # Zero-padding keeps the math exact for the real rows/columns.
    x_p = jnp.zeros((B_p, IN_p), bf16).at[:B, :IN].set(x.astype(bf16))
    w1_p = jnp.zeros((IN_p, H), bf16).at[:IN, :].set(w1.astype(bf16))
    w2_p = jnp.zeros((H, OUT_p), bf16).at[:, :OUT].set(w2.astype(bf16))
    b1_p = b1.astype(f32).reshape(1, H)
    b2_p = jnp.zeros((1, OUT_p), f32).at[:, :OUT].set(b2.astype(f32).reshape(1, OUT))

    grid = (B_p // tb,)

    flops = 2 * B_p * IN_p * H + 2 * B_p * H * OUT_p
    bytes_accessed = (
        x_p.size * 2 + w1_p.size * 2 + w2_p.size * 2
        + b1_p.size * 4 + b2_p.size * 4 + B_p * OUT_p * 4
    )

    out_p = pl.pallas_call(
        mlp_kernel,
        out_shape=jax.ShapeDtypeStruct((B_p, OUT_p), f32),
        grid=grid,
        in_specs=[
            pl.BlockSpec((tb, IN_p), lambda i: (i, 0)),     # x tile, pipelined
            pl.BlockSpec((IN_p, H), lambda i: (0, 0)),      # w1 resident
            pl.BlockSpec((1, H), lambda i: (0, 0)),         # b1 resident
            pl.BlockSpec((H, OUT_p), lambda i: (0, 0)),     # w2 resident
            pl.BlockSpec((1, OUT_p), lambda i: (0, 0)),     # b2 resident
        ],
        out_specs=pl.BlockSpec((tb, OUT_p), lambda i: (i, 0)),
        compiler_params=pltpu.CompilerParams(
            dimension_semantics=("parallel",),              # megacore on v7x
            vmem_limit_bytes=64 * 1024 * 1024,              # fits v5e/v6e/v7x
        ),
        cost_estimate=pl.CostEstimate(
            flops=flops, transcendentals=0, bytes_accessed=bytes_accessed
        ),
    )(x_p, w1_p, b1_p, w2_p, b2_p)

    return out_p[:B, :OUT]


def init_linear_params(key, fan_in, fan_out):
    """torch.nn.Linear default init: U(-1/sqrt(fan_in), 1/sqrt(fan_in)).

    Weight stored transposed as [fan_in, fan_out]; bias as [1, fan_out].
    """
    kw, kb = jax.random.split(key)
    bound = 1.0 / jnp.sqrt(fan_in)
    w = jax.random.uniform(kw, (fan_in, fan_out), jnp.float32, -bound, bound)
    b = jax.random.uniform(kb, (1, fan_out), jnp.float32, -bound, bound)
    return w, b


if __name__ == "__main__":
    # Small shapes consistent with MLP(in_features=32, out_features=32).
    batch = 32
    in_features = 32
    hidden = 512
    out_features = 32

    key = jax.random.PRNGKey(0)
    kx, k1, k2 = jax.random.split(key, 3)

    x = jax.random.normal(kx, (batch, in_features), dtype=jnp.float32)
    w1, b1 = init_linear_params(k1, in_features, hidden)
    w2, b2 = init_linear_params(k2, hidden, out_features)

    # tile_b=8 -> grid=(4,) so the batch pipeline is actually exercised.
    out = mlp_forward(x, w1, b1, w2, b2, tile_b=8)
    out = jax.block_until_ready(out)
    assert out.shape == (batch, out_features)

    # Reference with matching bf16-matmul / f32-accumulate semantics.
    bf16 = jnp.bfloat16
    ref_h = jnp.maximum(
        jnp.dot(x.astype(bf16), w1.astype(bf16),
                preferred_element_type=jnp.float32) + b1, 0.0)
    ref = jnp.dot(ref_h.astype(bf16), w2.astype(bf16),
                  preferred_element_type=jnp.float32) + b2
    assert jnp.allclose(out, ref, atol=1e-2, rtol=1e-2)

    # Sanity check against the pure-f32 math (looser: bf16 rounding drift).
    ref_f32 = jnp.maximum(x @ w1 + b1, 0.0) @ w2 + b2
    assert jnp.allclose(out, ref_f32, atol=5e-2, rtol=5e-2)

    print("KERNEL_OK")
</pallas_src>

<mosaic_0001>
module attributes {stable_mosaic.version = 11 : i64} {
  func.func @mlp_kernel(%arg0: i32, %arg1: memref<8x128xbf16, #tpu.memory_space<vmem>>, %arg2: memref<128x512xbf16, #tpu.memory_space<vmem>>, %arg3: memref<1x512xf32, #tpu.memory_space<vmem>>, %arg4: memref<512x128xbf16, #tpu.memory_space<vmem>>, %arg5: memref<1x128xf32, #tpu.memory_space<vmem>>, %arg6: memref<8x128xf32, #tpu.memory_space<vmem>>) attributes {dimension_semantics = [#tpu.dimension_semantics<parallel>], iteration_bounds = array<i64: 4>, scalar_prefetch = 0 : i64, scratch_operands = 0 : i64, tpu.core_type = #tpu.core_type<tc>, window_params = [{transform_indices = @transform_0, window_bounds = array<i64: 8, 128>}, {pipeline_mode = #tpu.pipeline_mode<synchronous>, transform_indices = @transform_1, window_bounds = array<i64: 128, 512>}, {pipeline_mode = #tpu.pipeline_mode<synchronous>, transform_indices = @transform_2, window_bounds = array<i64: 1, 512>}, {pipeline_mode = #tpu.pipeline_mode<synchronous>, transform_indices = @transform_3, window_bounds = array<i64: 512, 128>}, {pipeline_mode = #tpu.pipeline_mode<synchronous>, transform_indices = @transform_4, window_bounds = array<i64: 1, 128>}, {transform_indices = @transform_5, window_bounds = array<i64: 8, 128>}]} {
    %c0 = arith.constant 0 : index
    %c0_0 = arith.constant 0 : index
    %0 = vector.load %arg1[%c0, %c0_0] : memref<8x128xbf16, #tpu.memory_space<vmem>>, vector<8x128xbf16>
    %c0_1 = arith.constant 0 : index
    %c0_2 = arith.constant 0 : index
    %1 = vector.load %arg2[%c0_1, %c0_2] : memref<128x512xbf16, #tpu.memory_space<vmem>>, vector<128x512xbf16>
    %cst = arith.constant dense<0.000000e+00> : vector<8x512xf32>
    %2 = tpu.matmul %0, %1, %cst {dimension_numbers = #tpu.dot_dimension_numbers<[1], [0], [0], [1], [0, 0, 1, 1], [], []>} : vector<8x128xbf16>, vector<128x512xbf16>, vector<8x512xf32> -> vector<8x512xf32>
    %c0_3 = arith.constant 0 : index
    %c0_4 = arith.constant 0 : index
    %3 = vector.load %arg3[%c0_3, %c0_4] : memref<1x512xf32, #tpu.memory_space<vmem>>, vector<1x512xf32>
    %4 = vector.broadcast %3 : vector<1x512xf32> to vector<8x512xf32>
    %5 = arith.addf %2, %4 : vector<8x512xf32>
    %cst_5 = arith.constant 0.000000e+00 : f32
    %6 = vector.broadcast %cst_5 : f32 to vector<8x512xf32>
    %7 = arith.maximumf %5, %6 : vector<8x512xf32>
    %8 = arith.truncf %7 : vector<8x512xf32> to vector<8x512xbf16>
    %c0_6 = arith.constant 0 : index
    %c0_7 = arith.constant 0 : index
    %9 = vector.load %arg4[%c0_6, %c0_7] : memref<512x128xbf16, #tpu.memory_space<vmem>>, vector<512x128xbf16>
    %cst_8 = arith.constant dense<0.000000e+00> : vector<8x128xf32>
    %10 = tpu.matmul %8, %9, %cst_8 {dimension_numbers = #tpu.dot_dimension_numbers<[1], [0], [0], [1], [0, 0, 1, 1], [], []>} : vector<8x512xbf16>, vector<512x128xbf16>, vector<8x128xf32> -> vector<8x128xf32>
    %c0_9 = arith.constant 0 : index
    %c0_10 = arith.constant 0 : index
    %11 = vector.load %arg5[%c0_9, %c0_10] : memref<1x128xf32, #tpu.memory_space<vmem>>, vector<1x128xf32>
    %12 = vector.broadcast %11 : vector<1x128xf32> to vector<8x128xf32>
    %13 = arith.addf %10, %12 : vector<8x128xf32>
    %c0_11 = arith.constant 0 : index
    %c0_12 = arith.constant 0 : index
    %14 = vector.load %arg6[%c0_11, %c0_12] : memref<8x128xf32, #tpu.memory_space<vmem>>, vector<8x128xf32>
    tpu.vector_store %arg6[%c0_11, %c0_12], %13 {strides = array<i32>} : memref<8x128xf32, #tpu.memory_space<vmem>>, vector<8x128xf32>,
    return
  }
  func.func @transform_0(%arg0: i32) -> (i32, i32) {
    %c0_i32 = arith.constant 0 : i32
    %c0_i32_0 = arith.constant 0 : i32
    return %arg0, %c0_i32 : i32, i32
  }
  func.func @transform_1(%arg0: i32) -> (i32, i32) {
    %c0_i32 = arith.constant 0 : i32
    %c0_i32_0 = arith.constant 0 : i32
    %c0_i32_1 = arith.constant 0 : i32
    return %c0_i32, %c0_i32_0 : i32, i32
  }
  func.func @transform_2(%arg0: i32) -> (i32, i32) {
    %c0_i32 = arith.constant 0 : i32
    %c0_i32_0 = arith.constant 0 : i32
    %c0_i32_1 = arith.constant 0 : i32
    return %c0_i32, %c0_i32_0 : i32, i32
  }
  func.func @transform_3(%arg0: i32) -> (i32, i32) {
    %c0_i32 = arith.constant 0 : i32
    %c0_i32_0 = arith.constant 0 : i32
    %c0_i32_1 = arith.constant 0 : i32
    return %c0_i32, %c0_i32_0 : i32, i32
  }
  func.func @transform_4(%arg0: i32) -> (i32, i32) {
    %c0_i32 = arith.constant 0 : i32
    %c0_i32_0 = arith.constant 0 : i32
    %c0_i32_1 = arith.constant 0 : i32
    return %c0_i32, %c0_i32_0 : i32, i32
  }
  func.func @transform_5(%arg0: i32) -> (i32, i32) {
    %c0_i32 = arith.constant 0 : i32
    %c0_i32_0 = arith.constant 0 : i32
    return %arg0, %c0_i32 : i32, i32
  }
}

</mosaic_0001>

<llo_original>
// kernel: tpu_custom_call.1
$region0: #{tpu_custom_call.1}
  #allocation0 [shape = 'u32[]', space=smem, size = 0x4, offset = 0x4, fixed_abs, tag = 'smem constant byte address 0x4 - core index']
  #allocation1 [shape = 'u32[72,128]{1,0:T(1,128)}', space=vmem, size = 0x9000, scoped, tag = 'internal scratch']
  %s0 = inlined_call_operand.hbm [shape: bf16[32,128], index: 0, kind: input, shape index: {}]
  %s1 = inlined_call_operand.hbm [shape: bf16[128,512], index: 1, kind: input, shape index: {}]
  %s2 = inlined_call_operand.hbm [shape: f32[1,512], index: 2, kind: input, shape index: {}]
  %s3 = inlined_call_operand.hbm [shape: bf16[512,128], index: 3, kind: input, shape index: {}]
  %s4 = inlined_call_operand.vmem [shape: f32[1,128], index: 4, kind: input, shape index: {}]
  %s5 = inlined_call_operand.hbm [shape: f32[32,128], index: 5, kind: output, shape index: {}]
  %s6 = sld [smem:[#allocation0]]
  $region69: #{tpu_custom_call.1} parent=0
    _
  %s8 = ssub.s32 1, %s6
  %s9 = scalar_select 0, %s8, %s6
  $region1: #{tpu_custom_call.1} parent=0
    #allocation2 [shape = 'u8[4096]{0}', space=vmem, size = 0x1000, scoped, tag = 'input window, operand 0']
    #allocation3 [shape = 's32[2]{0}', space=sflag, size = 0x8, scoped, tag = 'scoped memory for tpu_custom_call.1']
    #allocation4 [shape = 's32[2]{0}', space=sflag, size = 0x8, scoped, tag = 'scoped memory for tpu_custom_call.1']
    #allocation5 [shape = 'u8[131072]{0}', space=vmem, size = 0x20000, scoped, tag = 'input window, operand 1, single buffered']
    #allocation6 [shape = 's32[1]{0}', space=sflag, size = 0x4, scoped, tag = 'scoped memory for tpu_custom_call.1']
    #allocation7 [shape = 'u8[2048]{0}', space=vmem, size = 0x800, scoped, tag = 'input window, operand 2, single buffered']
    #allocation8 [shape = 'u8[131072]{0}', space=vmem, size = 0x20000, scoped, tag = 'input window, operand 3, single buffered']
    #allocation9 [shape = 's32[1]{0}', space=sflag, size = 0x4, scoped, tag = 'scoped memory for tpu_custom_call.1']
    #allocation10 [shape = 'u8[8192]{0}', space=vmem, size = 0x2000, scoped, tag = 'output window, operand 0']
    %10 = vsyncpa [#allocation3], 0
    %s11 = scalar_lea.sflag [#allocation3], 1
    %12 = vsyncpa %s11, 0
    %13 = vsyncpa [#allocation6], 0
    %14 = vsyncpa [#allocation9], 0
    %15 = vsyncpa [#allocation4], 0
    %s16 = scalar_lea.sflag [#allocation4], 1
    %17 = vsyncpa %s16, 0
    loop: start=0, step=1, limit=6
    $region2: #{tpu_custom_call.1} parent=1 // loop_pre_header
      _
    $region3: #{tpu_custom_call.1} parent=1 // loop_header
      %s19 = sphi 0, %s23
      %p20 = scmp.ge.s32.totalorder %s19, 6
      %s29 = sphi 0, %s31
      %s32 = sphi 0, %s29
      %s33 = sphi 0, %s32
      %s49 = sphi 0, %s33
      %s53 = sphi 0, %s53
      %s55 = sphi 0, %s53
      %s56 = sphi 0, %s55
      %s70 = sphi 0, %s56
      %s74 = sphi 0, %s74
      %s76 = sphi 0, %s74
      %s77 = sphi 0, %s76
      %s91 = sphi 0, %s77
      %s95 = sphi 0, %s95
      %s97 = sphi 0, %s95
      %s98 = sphi 0, %s97
      %s112 = sphi 0, %s98
      %s116 = sphi 0, %s116
      %s118 = sphi 0, %s116
      %s119 = sphi 0, %s118
      %s133 = sphi 0, %s119
      %s139 = sphi 0, %s141
      %s142 = sphi 0, %s139
      %s143 = sphi 0, %s142
      %s159 = sphi 0, %s143
    $region4: #{tpu_custom_call.1} parent=1 // loop_header_branch
      %22 = sbr.rel (%p20) target = $region8
    $region5: #{tpu_custom_call.1} parent=1 // loop_body
      %s24 = ssub.s32 %s19, 1
      %s25 = ssub.s32 %s19, 2
      %s26 = sadd.s32 %s19, 1
      %s27 = ssub.s32 %s19, %s26
      %p28 = scmp.eq.s32.totalorder %s27, 0
      %s30 = sadd.s32 %s29, 1
      %s31 = scalar_select %p28, %s29, %s30
      %p34 = pneg %p28
      %p35 = scmp.eq.s32.totalorder %s19, 3
      %p36 = por %p34, %p35
      %p37 = scmp.ne.s32.totalorder %s29, %s32
      %p38 = scmp.eq.s32.totalorder %s19, 0
      %p39 = por %p37, %p38
      %p40 = scmp.ne.s32.totalorder %s29, %s32
      %p41 = scmp.eq.s32.totalorder %s24, 3
      %p42 = por %p40, %p41
      %p43 = scmp.ne.s32.totalorder %s32, %s33
      %p44 = scmp.eq.s32.totalorder %s24, 0
      %p45 = por %p43, %p44
      %p46 = scmp.ne.s32.totalorder %s32, %s33
      %p47 = scmp.eq.s32.totalorder %s25, 3
      %p48 = por %p46, %p47
      %p50 = scmp.ne.s32.totalorder %s33, %s49
      %p51 = scmp.eq.s32.totalorder %s25, 0
      %p52 = por %p50, %p51
      %s54 = sadd.s32 %s53, 1
      %p57 = scmp.eq.s32.totalorder %s19, 3
      %p58 = scmp.ne.s32.totalorder %s53, %s55
      %p59 = scmp.eq.s32.totalorder %s19, 0
      %p60 = por %p58, %p59
      %p61 = scmp.ne.s32.totalorder %s53, %s55
      %p62 = scmp.eq.s32.totalorder %s24, 3
      %p63 = por %p61, %p62
      %p64 = scmp.ne.s32.totalorder %s55, %s56
      %p65 = scmp.eq.s32.totalorder %s24, 0
      %p66 = por %p64, %p65
      %p67 = scmp.ne.s32.totalorder %s55, %s56
      %p68 = scmp.eq.s32.totalorder %s25, 3
      %p69 = por %p67, %p68
      %p71 = scmp.ne.s32.totalorder %s56, %s70
      %p72 = scmp.eq.s32.totalorder %s25, 0
      %p73 = por %p71, %p72
      %s75 = sadd.s32 %s74, 1
      %p78 = scmp.eq.s32.totalorder %s19, 3
      %p79 = scmp.ne.s32.totalorder %s74, %s76
      %p80 = scmp.eq.s32.totalorder %s19, 0
      %p81 = por %p79, %p80
      %p82 = scmp.ne.s32.totalorder %s74, %s76
      %p83 = scmp.eq.s32.totalorder %s24, 3
      %p84 = por %p82, %p83
      %p85 = scmp.ne.s32.totalorder %s76, %s77
      %p86 = scmp.eq.s32.totalorder %s24, 0
      %p87 = por %p85, %p86
      %p88 = scmp.ne.s32.totalorder %s76, %s77
      %p89 = scmp.eq.s32.totalorder %s25, 3
      %p90 = por %p88, %p89
      %p92 = scmp.ne.s32.totalorder %s77, %s91
      %p93 = scmp.eq.s32.totalorder %s25, 0
      %p94 = por %p92, %p93
      %s96 = sadd.s32 %s95, 1
      %p99 = scmp.eq.s32.totalorder %s19, 3
      %p100 = scmp.ne.s32.totalorder %s95, %s97
      %p101 = scmp.eq.s32.totalorder %s19, 0
      %p102 = por %p100, %p101
      %p103 = scmp.ne.s32.totalorder %s95, %s97
      %p104 = scmp.eq.s32.totalorder %s24, 3
      %p105 = por %p103, %p104
      %p106 = scmp.ne.s32.totalorder %s97, %s98
      %p107 = scmp.eq.s32.totalorder %s24, 0
      %p108 = por %p106, %p107
      %p109 = scmp.ne.s32.totalorder %s97, %s98
      %p110 = scmp.eq.s32.totalorder %s25, 3
      %p111 = por %p109, %p110
      %p113 = scmp.ne.s32.totalorder %s98, %s112
      %p114 = scmp.eq.s32.totalorder %s25, 0
      %p115 = por %p113, %p114
      %s117 = sadd.s32 %s116, 1
      %p120 = scmp.eq.s32.totalorder %s19, 3
      %p121 = scmp.ne.s32.totalorder %s116, %s118
      %p122 = scmp.eq.s32.totalorder %s19, 0
      %p123 = por %p121, %p122
      %p124 = scmp.ne.s32.totalorder %s116, %s118
      %p125 = scmp.eq.s32.totalorder %s24, 3
      %p126 = por %p124, %p125
      %p127 = scmp.ne.s32.totalorder %s118, %s119
      %p128 = scmp.eq.s32.totalorder %s24, 0
      %p129 = por %p127, %p128
      %p130 = scmp.ne.s32.totalorder %s118, %s119
      %p131 = scmp.eq.s32.totalorder %s25, 3
      %p132 = por %p130, %p131
      %p134 = scmp.ne.s32.totalorder %s119, %s133
      %p135 = scmp.eq.s32.totalorder %s25, 0
      %p136 = por %p134, %p135
      %s137 = ssub.s32 %s19, %s26
      %p138 = scmp.eq.s32.totalorder %s137, 0
      %s140 = sadd.s32 %s139, 1
      %s141 = scalar_select %p138, %s139, %s140
      %p144 = pneg %p138
      %p145 = scmp.eq.s32.totalorder %s19, 3
      %p146 = por %p144, %p145
      %p147 = scmp.ne.s32.totalorder %s139, %s142
      %p148 = scmp.eq.s32.totalorder %s19, 0
      %p149 = por %p147, %p148
      %p150 = scmp.ne.s32.totalorder %s139, %s142
      %p151 = scmp.eq.s32.totalorder %s24, 3
      %p152 = por %p150, %p151
      %p153 = scmp.ne.s32.totalorder %s142, %s143
      %p154 = scmp.eq.s32.totalorder %s24, 0
      %p155 = por %p153, %p154
      %p156 = scmp.ne.s32.totalorder %s142, %s143
      %p157 = scmp.eq.s32.totalorder %s25, 3
      %p158 = por %p156, %p157
      %p160 = scmp.ne.s32.totalorder %s143, %s159
      %p161 = scmp.eq.s32.totalorder %s25, 0
      %p162 = por %p160, %p161
      %p163 = scmp.le.s32.totalorder 1, %s19
      %p164 = scmp.lt.s32.totalorder %s19, 5
      %p165 = pnand %p163, %p164
      %p166 = pneg %p165
      // Predicated region
      $region9: #{tpu_custom_call.1} parent=5 // pred_check
        _
      $region10: #{tpu_custom_call.1} parent=5 // pred_check_branch
        %168 = sbr.rel (%p165) target = $region12
      $region11: #{tpu_custom_call.1} parent=5 // pred_region
        %s169 = ssub.s32 %s19, 1
        // Predicated region
        $region13: #{tpu_custom_call.1} parent=11 // pred_check
          %p170 = pneg %p66
        $region14: #{tpu_custom_call.1} parent=11 // pred_check_branch
          %172 = sbr.rel (%p170) target = $region16
        $region15: #{tpu_custom_call.1} parent=11 // pred_region
          %174 = vsyncadd [#allocation6], 0
          %s175 = sshll.u32 %s1, 4
          %s176 = int_to_ptr.hbm [resolvable:$true] %s175
          %s177 = sshll.u32 [#allocation5], 4
          %s178 = int_to_ptr.vmem [resolvable:$true] %s177
          %183 = dma.hbm_to_vmem [thread:$0]  %s176, 4096, %s178, [#allocation6], 256, 256, 16
        $region16: #{tpu_custom_call.1} parent=11 // pred_fallthru
          _
        // Predicated region
        $region17: #{tpu_custom_call.1} parent=11 // pred_check
          %p184 = pneg %p87
        $region18: #{tpu_custom_call.1} parent=11 // pred_check_branch
          %186 = sbr.rel (%p184) target = $region20
        $region19: #{tpu_custom_call.1} parent=11 // pred_region
          %188 = vsyncadd [#allocation6], 0
          %s190 = sshll.u32 %s2, 4
          %s191 = int_to_ptr.hbm [resolvable:$true] %s190
          %s192 = sshll.u32 [#allocation7], 4
          %s193 = int_to_ptr.vmem [resolvable:$true] %s192
          %195 = dma.hbm_to_vmem [thread:$0]  %s191, 64, %s193, [#allocation6]
        $region20: #{tpu_custom_call.1} parent=11 // pred_fallthru
          _
        // Predicated region
        $region21: #{tpu_custom_call.1} parent=11 // pred_check
          %p196 = pneg %p108
        $region22: #{tpu_custom_call.1} parent=11 // pred_check_branch
          %198 = sbr.rel (%p196) target = $region24
        $region23: #{tpu_custom_call.1} parent=11 // pred_region
          %200 = vsyncadd [#allocation9], 0
          %s201 = sshll.u32 %s3, 4
          %s202 = int_to_ptr.hbm [resolvable:$true] %s201
          %s203 = sshll.u32 [#allocation8], 4
          %s204 = int_to_ptr.vmem [resolvable:$true] %s203
          %209 = dma.hbm_to_vmem [thread:$0]  %s202, 4096, %s204, [#allocation9], 64, 64, 4
        $region24: #{tpu_custom_call.1} parent=11 // pred_fallthru
          _
        // Predicated region
        $region25: #{tpu_custom_call.1} parent=11 // pred_check
          %p210 = pneg %p129
        $region26: #{tpu_custom_call.1} parent=11 // pred_check_branch
          %212 = sbr.rel (%p210) target = $region28
        $region27: #{tpu_custom_call.1} parent=11 // pred_region
          _
        $region28: #{tpu_custom_call.1} parent=11 // pred_fallthru
          _
      $region12: #{tpu_custom_call.1} parent=5 // pred_fallthru
        _
      %p213 = scmp.lt.s32.totalorder %s19, 4
      // Predicated region
      $region29: #{tpu_custom_call.1} parent=5 // pred_check
        %p214 = pneg %p213
      $region30: #{tpu_custom_call.1} parent=5 // pred_check_branch
        %216 = sbr.rel (%p214) target = $region32
      $region31: #{tpu_custom_call.1} parent=5 // pred_region
        // Predicated region
        $region33: #{tpu_custom_call.1} parent=31 // pred_check
          %p217 = pneg %p39
        $region34: #{tpu_custom_call.1} parent=31 // pred_check_branch
          %219 = sbr.rel (%p217) target = $region36
        $region35: #{tpu_custom_call.1} parent=31 // pred_region
          %s220 = sand.u32 %s29, 1
          %s221 = scalar_lea.sflag [#allocation3], %s220
          %s222 = sand.u32 %s29, 1
          %s223 = smul.addr %s222, 4
          %s224 = scalar_lea.vmem [#allocation2], %s223
          %226 = vsyncadd %s221, 0
          %s227 = smul.addr %s19, 4
          %s228 = scalar_lea.hbm %s0, %s227
          %s230 = sshll.u32 %s228, 4
          %s231 = int_to_ptr.hbm [resolvable:$true] %s230
          %s232 = sshll.u32 %s224, 4
          %s233 = int_to_ptr.vmem [resolvable:$true] %s232
          %235 = dma.hbm_to_vmem [thread:$0]  %s231, 64, %s233, %s221
        $region36: #{tpu_custom_call.1} parent=31 // pred_fallthru
          _
      $region32: #{tpu_custom_call.1} parent=5 // pred_fallthru
        _
      %p236 = scmp.le.s32.totalorder 1, %s19
      %p237 = scmp.lt.s32.totalorder %s19, 5
      %p238 = pnand %p236, %p237
      %p239 = pneg %p238
      // Predicated region
      $region37: #{tpu_custom_call.1} parent=5 // pred_check
        _
      $region38: #{tpu_custom_call.1} parent=5 // pred_check_branch
        %241 = sbr.rel (%p238) target = $region40
      $region39: #{tpu_custom_call.1} parent=5 // pred_region
        %s242 = ssub.s32 %s19, 1
        %s243 = sand.u32 %s32, 1
        %s244 = scalar_lea.sflag [#allocation3], %s243
        %s245 = sand.u32 %s32, 1
        %s246 = smul.addr %s245, 4
        %s247 = scalar_lea.vmem [#allocation2], %s246
        // Predicated region
        $region41: #{tpu_custom_call.1} parent=39 // pred_check
          %p248 = pneg %p45
        $region42: #{tpu_custom_call.1} parent=39 // pred_check_branch
          %250 = sbr.rel (%p248) target = $region44
        $region43: #{tpu_custom_call.1} parent=39 // pred_region
          %252 = dma.done %s244, 64
        $region44: #{tpu_custom_call.1} parent=39 // pred_fallthru
          _
        // Predicated region
        $region45: #{tpu_custom_call.1} parent=39 // pred_check
          %p253 = pneg %p66
        $region46: #{tpu_custom_call.1} parent=39 // pred_check_branch
          %255 = sbr.rel (%p253) target = $region48
        $region47: #{tpu_custom_call.1} parent=39 // pred_region
          %257 = dma.done [#allocation6], 4096
        $region48: #{tpu_custom_call.1} parent=39 // pred_fallthru
          _
        // Predicated region
        $region49: #{tpu_custom_call.1} parent=39 // pred_check
          %p258 = pneg %p87
        $region50: #{tpu_custom_call.1} parent=39 // pred_check_branch
          %260 = sbr.rel (%p258) target = $region52
        $region51: #{tpu_custom_call.1} parent=39 // pred_region
          %262 = dma.done [#allocation6], 64
        $region52: #{tpu_custom_call.1} parent=39 // pred_fallthru
          _
        // Predicated region
        $region53: #{tpu_custom_call.1} parent=39 // pred_check
          %p263 = pneg %p108
        $region54: #{tpu_custom_call.1} parent=39 // pred_check_branch
          %265 = sbr.rel (%p263) target = $region56
        $region55: #{tpu_custom_call.1} parent=39 // pred_region
          %267 = dma.done [#allocation9], 4096
        $region56: #{tpu_custom_call.1} parent=39 // pred_fallthru
          _
        %s268 = sand.u32 %s32, 1
        %s269 = scalar_lea.sflag [#allocation3], %s268
        %s270 = sand.u32 %s32, 1
        %s271 = smul.addr %s270, 4
        %s272 = scalar_lea.vmem [#allocation2], %s271
        %p273 = pneg %p45
        %p274 = pneg %p42
        %p275 = pneg %p66
        %p276 = pneg %p63
        %p277 = pneg %p87
        %p278 = pneg %p84
        %p279 = pneg %p108
        %p280 = pneg %p105
        %p281 = pneg %p129
        %p282 = pneg %p126
        %p283 = pneg %p155
        %p284 = pneg %p152
        %s285 = sand.u32 %s142, 1
        %s286 = scalar_lea.sflag [#allocation4], %s285
        %s287 = sand.u32 %s142, 1
        %s288 = smul.addr %s287, 8
        %s289 = scalar_lea.vmem [#allocation10], %s288
        %v290 = vld [vmem:[%s247] sm:$0xf]
        %v291 = vld [vmem:[#allocation5] sm:$0xff]
        %v292 = vld [vmem:[#allocation5 + $0x8] sm:$0xff]
        %v293 = vld [vmem:[#allocation5 + $0x10] sm:$0xff]
        %v294 = vld [vmem:[#allocation5 + $0x18] sm:$0xff]
        %v295 = vld [vmem:[#allocation5 + $0x20] sm:$0xff]
        %v296 = vld [vmem:[#allocation5 + $0x28] sm:$0xff]
        %v297 = vld [vmem:[#allocation5 + $0x30] sm:$0xff]
        %v298 = vld [vmem:[#allocation5 + $0x38] sm:$0xff]
        %v299 = vld [vmem:[#allocation5 + $0x40] sm:$0xff]
        %v300 = vld [vmem:[#allocation5 + $0x48] sm:$0xff]
        %v301 = vld [vmem:[#allocation5 + $0x50] sm:$0xff]
        %v302 = vld [vmem:[#allocation5 + $0x58] sm:$0xff]
        %v303 = vld [vmem:[#allocation5 + $0x60] sm:$0xff]
        %v304 = vld [vmem:[#allocation5 + $0x68] sm:$0xff]
        %v305 = vld [vmem:[#allocation5 + $0x70] sm:$0xff]
        %v306 = vld [vmem:[#allocation5 + $0x78] sm:$0xff]
        %v307 = vld [vmem:[#allocation5 + $0x80] sm:$0xff]
        %v308 = vld [vmem:[#allocation5 + $0x88] sm:$0xff]
        %v309 = vld [vmem:[#allocation5 + $0x90] sm:$0xff]
        %v310 = vld [vmem:[#allocation5 + $0x98] sm:$0xff]
        %v311 = vld [vmem:[#allocation5 + $0xa0] sm:$0xff]
        %v312 = vld [vmem:[#allocation5 + $0xa8] sm:$0xff]
        %v313 = vld [vmem:[#allocation5 + $0xb0] sm:$0xff]
        %v314 = vld [vmem:[#allocation5 + $0xb8] sm:$0xff]
        %v315 = vld [vmem:[#allocation5 + $0xc0] sm:$0xff]
        %v316 = vld [vmem:[#allocation5 + $0xc8] sm:$0xff]
        %v317 = vld [vmem:[#allocation5 + $0xd0] sm:$0xff]
        %v318 = vld [vmem:[#allocation5 + $0xd8] sm:$0xff]
        %v319 = vld [vmem:[#allocation5 + $0xe0] sm:$0xff]
        %v320 = vld [vmem:[#allocation5 + $0xe8] sm:$0xff]
        %v321 = vld [vmem:[#allocation5 + $0xf0] sm:$0xff]
        %v322 = vld [vmem:[#allocation5 + $0xf8] sm:$0xff]
        %v323 = vld [vmem:[#allocation7] sm:$0xf]
        %v325 = vperm.slane %v323, 0
        %v326 = vperm.slane %v323, 1
        %v327 = vperm.slane %v323, 2
        %v328 = vperm.slane %v323, 3
        %v365 = vunpack.c.l.b16 %v291
        %v366 = vunpack.c.h.b16 %v291
        %v367 = vunpack.c.l.b16 %v292
        %v368 = vunpack.c.h.b16 %v292
        %v369 = vunpack.c.l.b16 %v293
        %v370 = vunpack.c.h.b16 %v293
        %v371 = vunpack.c.l.b16 %v294
        %v372 = vunpack.c.h.b16 %v294
        %v373 = vunpack.c.l.b16 %v295
        %v374 = vunpack.c.h.b16 %v295
        %v375 = vunpack.c.l.b16 %v296
        %v376 = vunpack.c.h.b16 %v296
        %v377 = vunpack.c.l.b16 %v297
        %v378 = vunpack.c.h.b16 %v297
        %v379 = vunpack.c.l.b16 %v298
        %v380 = vunpack.c.h.b16 %v298
        %v381 = vunpack.c.l.b16 %v299
        %v382 = vunpack.c.h.b16 %v299
        %v383 = vunpack.c.l.b16 %v300
        %v384 = vunpack.c.h.b16 %v300
        %v385 = vunpack.c.l.b16 %v301
        %v386 = vunpack.c.h.b16 %v301
        %v387 = vunpack.c.l.b16 %v302
        %v388 = vunpack.c.h.b16 %v302
        %v389 = vunpack.c.l.b16 %v303
        %v390 = vunpack.c.h.b16 %v303
        %v391 = vunpack.c.l.b16 %v304
        %v392 = vunpack.c.h.b16 %v304
        %v393 = vunpack.c.l.b16 %v305
        %v394 = vunpack.c.h.b16 %v305
        %v395 = vunpack.c.l.b16 %v306
        %v396 = vunpack.c.h.b16 %v306
        %v397 = vunpack.c.l.b16 %v307
        %v398 = vunpack.c.h.b16 %v307
        %v399 = vunpack.c.l.b16 %v308
        %v400 = vunpack.c.h.b16 %v308
        %v401 = vunpack.c.l.b16 %v309
        %v402 = vunpack.c.h.b16 %v309
        %v403 = vunpack.c.l.b16 %v310
        %v404 = vunpack.c.h.b16 %v310
        %v405 = vunpack.c.l.b16 %v311
        %v406 = vunpack.c.h.b16 %v311
        %v407 = vunpack.c.l.b16 %v312
        %v408 = vunpack.c.h.b16 %v312
        %v409 = vunpack.c.l.b16 %v313
        %v410 = vunpack.c.h.b16 %v313
        %v411 = vunpack.c.l.b16 %v314
        %v412 = vunpack.c.h.b16 %v314
        %v413 = vunpack.c.l.b16 %v315
        %v414 = vunpack.c.h.b16 %v315
        %v415 = vunpack.c.l.b16 %v316
        %v416 = vunpack.c.h.b16 %v316
        %v417 = vunpack.c.l.b16 %v317
        %v418 = vunpack.c.h.b16 %v317
        %v419 = vunpack.c.l.b16 %v318
        %v420 = vunpack.c.h.b16 %v318
        %v421 = vunpack.c.l.b16 %v319
        %v422 = vunpack.c.h.b16 %v319
        %v423 = vunpack.c.l.b16 %v320
        %v424 = vunpack.c.h.b16 %v320
        %v425 = vunpack.c.l.b16 %v321
        %v426 = vunpack.c.h.b16 %v321
        %v427 = vunpack.c.l.b16 %v322
        %v428 = vunpack.c.h.b16 %v322
        %v429 = vpack.c.b16 %v369, %v365
        %v430 = vpack.c.b16 %v370, %v366
        %v431 = vpack.c.b16 %v371, %v367
        %v432 = vpack.c.b16 %v372, %v368
        %v433 = vpack.c.b16 %v377, %v373
        %v434 = vpack.c.b16 %v378, %v374
        %v435 = vpack.c.b16 %v379, %v375
        %v436 = vpack.c.b16 %v380, %v376
        %v437 = vpack.c.b16 %v385, %v381
        %v438 = vpack.c.b16 %v386, %v382
        %v439 = vpack.c.b16 %v387, %v383
        %v440 = vpack.c.b16 %v388, %v384
        %v441 = vpack.c.b16 %v393, %v389
        %v442 = vpack.c.b16 %v394, %v390
        %v443 = vpack.c.b16 %v395, %v391
        %v444 = vpack.c.b16 %v396, %v392
        %v445 = vpack.c.b16 %v401, %v397
        %v446 = vpack.c.b16 %v402, %v398
        %v447 = vpack.c.b16 %v403, %v399
        %v448 = vpack.c.b16 %v404, %v400
        %v449 = vpack.c.b16 %v409, %v405
        %v450 = vpack.c.b16 %v410, %v406
        %v451 = vpack.c.b16 %v411, %v407
        %v452 = vpack.c.b16 %v412, %v408
        %v453 = vpack.c.b16 %v417, %v413
        %v454 = vpack.c.b16 %v418, %v414
        %v455 = vpack.c.b16 %v419, %v415
        %v456 = vpack.c.b16 %v420, %v416
        %v457 = vpack.c.b16 %v425, %v421
        %v458 = vpack.c.b16 %v426, %v422
        %v459 = vpack.c.b16 %v427, %v423
        %v460 = vpack.c.b16 %v428, %v424
        %493 = vmatpush.bf16.msra.mxu0 %v457
        %494 = vmatpush.bf16.msra.mxu0 %v453
        %495 = vmatpush.bf16.msra.mxu0 %v449
        %496 = vmatpush.bf16.msra.mxu0 %v445
        %497 = vmatpush.bf16.msra.mxu0 %v441
        %498 = vmatpush.bf16.msra.mxu0 %v437
        %499 = vmatpush.bf16.msra.mxu0 %v433
        %500 = vmatpush.bf16.msra.mxu0 %v429
        %501 = vmatmul.bf16.gmra.mxu0 %v290
        %v502 = vpop.f32.mrf.mxu0
        %v503 = vadd.f32 %v325, %v502
        %v504 = vpop.f32.mrf.mxu0
        %505 = vdwg.mxu0
        %506 = vmatpush.bf16.msra.mxu0 %v458
        %507 = vmatpush.bf16.msra.mxu0 %v454
        %508 = vmatpush.bf16.msra.mxu0 %v450
        %509 = vmatpush.bf16.msra.mxu0 %v446
        %510 = vmatpush.bf16.msra.mxu0 %v442
        %511 = vmatpush.bf16.msra.mxu0 %v438
        %512 = vmatpush.bf16.msra.mxu0 %v434
        %513 = vmatpush.bf16.msra.mxu0 %v430
        %514 = vmatmul.bf16.gmra.mxu0 %v290
        %v515 = vpop.f32.mrf.mxu0
        %v516 = vadd.f32 %v326, %v515
        %v517 = vpop.f32.mrf.mxu0
        %518 = vdwg.mxu0
        %519 = vmatpush.bf16.msra.mxu0 %v459
        %520 = vmatpush.bf16.msra.mxu0 %v455
        %521 = vmatpush.bf16.msra.mxu0 %v451
        %522 = vmatpush.bf16.msra.mxu0 %v447
        %523 = vmatpush.bf16.msra.mxu0 %v443
        %524 = vmatpush.bf16.msra.mxu0 %v439
        %525 = vmatpush.bf16.msra.mxu0 %v435
        %526 = vmatpush.bf16.msra.mxu0 %v431
        %527 = vmatmul.bf16.gmra.mxu0 %v290
        %v528 = vpop.f32.mrf.mxu0
        %v529 = vadd.f32 %v327, %v528
        %v530 = vpop.f32.mrf.mxu0
        %531 = vdwg.mxu0
        %532 = vmatpush.bf16.msra.mxu0 %v460
        %533 = vmatpush.bf16.msra.mxu0 %v456
        %534 = vmatpush.bf16.msra.mxu0 %v452
        %535 = vmatpush.bf16.msra.mxu0 %v448
        %536 = vmatpush.bf16.msra.mxu0 %v444
        %537 = vmatpush.bf16.msra.mxu0 %v440
        %538 = vmatpush.bf16.msra.mxu0 %v436
        %539 = vmatpush.bf16.msra.mxu0 %v432
        %540 = vmatmul.bf16.gmra.mxu0 %v290
        %v541 = vpop.f32.mrf.mxu0
        %v542 = vadd.f32 %v328, %v541
        %v543 = vpop.f32.mrf.mxu0
        %544 = vdwg.mxu0
        %v545 = vmax.f32 %v503, 0.0
        %v546 = vmax.f32 %v516, 0.0
        %v547 = vmax.f32 %v529, 0.0
        %v548 = vmax.f32 %v542, 0.0
        %v549 = vpack.c.bf16 %v545, %v545
        %v550 = vpack.c.bf16 %v546, %v546
        %v551 = vpack.c.bf16 %v547, %v547
        %v552 = vpack.c.bf16 %v548, %v548
        %v553 = vld [vmem:[#allocation8] sm:$0xf]
        %v554 = vld [vmem:[#allocation8 + $0x4] sm:$0xf]
        %v555 = vld [vmem:[#allocation8 + $0x8] sm:$0xf]
        %v556 = vld [vmem:[#allocation8 + $0xc] sm:$0xf]
        %v557 = vld [vmem:[#allocation8 + $0x10] sm:$0xf]
        %v558 = vld [vmem:[#allocation8 + $0x14] sm:$0xf]
        %v559 = vld [vmem:[#allocation8 + $0x18] sm:$0xf]
        %v560 = vld [vmem:[#allocation8 + $0x1c] sm:$0xf]
        %v561 = vld [vmem:[#allocation8 + $0x20] sm:$0xf]
        %v562 = vld [vmem:[#allocation8 + $0x24] sm:$0xf]
        %v563 = vld [vmem:[#allocation8 + $0x28] sm:$0xf]
        %v564 = vld [vmem:[#allocation8 + $0x2c] sm:$0xf]
        %v565 = vld [vmem:[#allocation8 + $0x30] sm:$0xf]
        %v566 = vld [vmem:[#allocation8 + $0x34] sm:$0xf]
        %v567 = vld [vmem:[#allocation8 + $0x38] sm:$0xf]
        %v568 = vld [vmem:[#allocation8 + $0x3c] sm:$0xf]
        %v569 = vld [vmem:[#allocation8 + $0x40] sm:$0xf]
        %v570 = vld [vmem:[#allocation8 + $0x44] sm:$0xf]
        %v571 = vld [vmem:[#allocation8 + $0x48] sm:$0xf]
        %v572 = vld [vmem:[#allocation8 + $0x4c] sm:$0xf]
        %v573 = vld [vmem:[#allocation8 + $0x50] sm:$0xf]
        %v574 = vld [vmem:[#allocation8 + $0x54] sm:$0xf]
        %v575 = vld [vmem:[#allocation8 + $0x58] sm:$0xf]
        %v576 = vld [vmem:[#allocation8 + $0x5c] sm:$0xf]
        %v577 = vld [vmem:[#allocation8 + $0x60] sm:$0xf]
        %v578 = vld [vmem:[#allocation8 + $0x64] sm:$0xf]
        %v579 = vld [vmem:[#allocation8 + $0x68] sm:$0xf]
        %v580 = vld [vmem:[#allocation8 + $0x6c] sm:$0xf]
        %v581 = vld [vmem:[#allocation8 + $0x70] sm:$0xf]
        %v582 = vld [vmem:[#allocation8 + $0x74] sm:$0xf]
        %v583 = vld [vmem:[#allocation8 + $0x78] sm:$0xf]
        %v584 = vld [vmem:[#allocation8 + $0x7c] sm:$0xf]
        %v585 = vld [vmem:[#allocation8 + $0x80] sm:$0xf]
        %v586 = vld [vmem:[#allocation8 + $0x84] sm:$0xf]
        %v587 = vld [vmem:[#allocation8 + $0x88] sm:$0xf]
        %v588 = vld [vmem:[#allocation8 + $0x8c] sm:$0xf]
        %v589 = vld [vmem:[#allocation8 + $0x90] sm:$0xf]
        %v590 = vld [vmem:[#allocation8 + $0x94] sm:$0xf]
        %v591 = vld [vmem:[#allocation8 + $0x98] sm:$0xf]
        %v592 = vld [vmem:[#allocation8 + $0x9c] sm:$0xf]
        %v593 = vld [vmem:[#allocation8 + $0xa0] sm:$0xf]
        %v594 = vld [vmem:[#allocation8 + $0xa4] sm:$0xf]
        %v595 = vld [vmem:[#allocation8 + $0xa8] sm:$0xf]
        %v596 = vld [vmem:[#allocation8 + $0xac] sm:$0xf]
        %v597 = vld [vmem:[#allocation8 + $0xb0] sm:$0xf]
        %v598 = vld [vmem:[#allocation8 + $0xb4] sm:$0xf]
        %v599 = vld [vmem:[#allocation8 + $0xb8] sm:$0xf]
        %v600 = vld [vmem:[#allocation8 + $0xbc] sm:$0xf]
        %v601 = vld [vmem:[#allocation8 + $0xc0] sm:$0xf]
        %v602 = vld [vmem:[#allocation8 + $0xc4] sm:$0xf]
        %v603 = vld [vmem:[#allocation8 + $0xc8] sm:$0xf]
        %v604 = vld [vmem:[#allocation8 + $0xcc] sm:$0xf]
        %v605 = vld [vmem:[#allocation8 + $0xd0] sm:$0xf]
        %v606 = vld [vmem:[#allocation8 + $0xd4] sm:$0xf]
        %v607 = vld [vmem:[#allocation8 + $0xd8] sm:$0xf]
        %v608 = vld [vmem:[#allocation8 + $0xdc] sm:$0xf]
        %v609 = vld [vmem:[#allocation8 + $0xe0] sm:$0xf]
        %v610 = vld [vmem:[#allocation8 + $0xe4] sm:$0xf]
        %v611 = vld [vmem:[#allocation8 + $0xe8] sm:$0xf]
        %v612 = vld [vmem:[#allocation8 + $0xec] sm:$0xf]
        %v613 = vld [vmem:[#allocation8 + $0xf0] sm:$0xf]
        %v614 = vld [vmem:[#allocation8 + $0xf4] sm:$0xf]
        %v615 = vld [vmem:[#allocation8 + $0xf8] sm:$0xf]
        %v616 = vld [vmem:[#allocation8 + $0xfc] sm:$0xf]
        %v617 = vld [vmem:[%s4] sm:$0x1]
        %v619 = vperm.slane %v617, 0
        %v685 = vunpack.c.l.b16 %v553
        %v686 = vunpack.c.l.b16 %v554
        %v687 = vunpack.c.l.b16 %v555
        %v688 = vunpack.c.l.b16 %v556
        %v689 = vunpack.c.l.b16 %v557
        %v690 = vunpack.c.l.b16 %v558
        %v691 = vunpack.c.l.b16 %v559
        %v692 = vunpack.c.l.b16 %v560
        %v693 = vunpack.c.l.b16 %v561
        %v694 = vunpack.c.l.b16 %v562
        %v695 = vunpack.c.l.b16 %v563
        %v696 = vunpack.c.l.b16 %v564
        %v697 = vunpack.c.l.b16 %v565
        %v698 = vunpack.c.l.b16 %v566
        %v699 = vunpack.c.l.b16 %v567
        %v700 = vunpack.c.l.b16 %v568
        %v701 = vunpack.c.l.b16 %v569
        %v702 = vunpack.c.l.b16 %v570
        %v703 = vunpack.c.l.b16 %v571
        %v704 = vunpack.c.l.b16 %v572
        %v705 = vunpack.c.l.b16 %v573
        %v706 = vunpack.c.l.b16 %v574
        %v707 = vunpack.c.l.b16 %v575
        %v708 = vunpack.c.l.b16 %v576
        %v709 = vunpack.c.l.b16 %v577
        %v710 = vunpack.c.l.b16 %v578
        %v711 = vunpack.c.l.b16 %v579
        %v712 = vunpack.c.l.b16 %v580
        %v713 = vunpack.c.l.b16 %v581
        %v714 = vunpack.c.l.b16 %v582
        %v715 = vunpack.c.l.b16 %v583
        %v716 = vunpack.c.l.b16 %v584
        %v717 = vunpack.c.l.b16 %v585
        %v718 = vunpack.c.l.b16 %v586
        %v719 = vunpack.c.l.b16 %v587
        %v720 = vunpack.c.l.b16 %v588
        %v721 = vunpack.c.l.b16 %v589
        %v722 = vunpack.c.l.b16 %v590
        %v723 = vunpack.c.l.b16 %v591
        %v724 = vunpack.c.l.b16 %v592
        %v725 = vunpack.c.l.b16 %v593
        %v726 = vunpack.c.l.b16 %v594
        %v727 = vunpack.c.l.b16 %v595
        %v728 = vunpack.c.l.b16 %v596
        %v729 = vunpack.c.l.b16 %v597
        %v730 = vunpack.c.l.b16 %v598
        %v731 = vunpack.c.l.b16 %v599
        %v732 = vunpack.c.l.b16 %v600
        %v733 = vunpack.c.l.b16 %v601
        %v734 = vunpack.c.l.b16 %v602
        %v735 = vunpack.c.l.b16 %v603
        %v736 = vunpack.c.l.b16 %v604
        %v737 = vunpack.c.l.b16 %v605
        %v738 = vunpack.c.l.b16 %v606
        %v739 = vunpack.c.l.b16 %v607
        %v740 = vunpack.c.l.b16 %v608
        %v741 = vunpack.c.l.b16 %v609
        %v742 = vunpack.c.l.b16 %v610
        %v743 = vunpack.c.l.b16 %v611
        %v744 = vunpack.c.l.b16 %v612
        %v745 = vunpack.c.l.b16 %v613
        %v746 = vunpack.c.l.b16 %v614
        %v747 = vunpack.c.l.b16 %v615
        %v748 = vunpack.c.l.b16 %v616
        %v749 = vpack.c.b16 %v686, %v685
        %v750 = vpack.c.b16 %v688, %v687
        %v751 = vpack.c.b16 %v690, %v689
        %v752 = vpack.c.b16 %v692, %v691
        %v753 = vpack.c.b16 %v694, %v693
        %v754 = vpack.c.b16 %v696, %v695
        %v755 = vpack.c.b16 %v698, %v697
        %v756 = vpack.c.b16 %v700, %v699
        %v757 = vpack.c.b16 %v702, %v701
        %v758 = vpack.c.b16 %v704, %v703
        %v759 = vpack.c.b16 %v706, %v705
        %v760 = vpack.c.b16 %v708, %v707
        %v761 = vpack.c.b16 %v710, %v709
        %v762 = vpack.c.b16 %v712, %v711
        %v763 = vpack.c.b16 %v714, %v713
        %v764 = vpack.c.b16 %v716, %v715
        %v765 = vpack.c.b16 %v718, %v717
        %v766 = vpack.c.b16 %v720, %v719
        %v767 = vpack.c.b16 %v722, %v721
        %v768 = vpack.c.b16 %v724, %v723
        %v769 = vpack.c.b16 %v726, %v725
        %v770 = vpack.c.b16 %v728, %v727
        %v771 = vpack.c.b16 %v730, %v729
        %v772 = vpack.c.b16 %v732, %v731
        %v773 = vpack.c.b16 %v734, %v733
        %v774 = vpack.c.b16 %v736, %v735
        %v775 = vpack.c.b16 %v738, %v737
        %v776 = vpack.c.b16 %v740, %v739
        %v777 = vpack.c.b16 %v742, %v741
        %v778 = vpack.c.b16 %v744, %v743
        %v779 = vpack.c.b16 %v746, %v745
        %v780 = vpack.c.b16 %v748, %v747
        %813 = vmatpush.bf16.msra.mxu0 %v756
        %814 = vmatpush.bf16.msra.mxu0 %v755
        %815 = vmatpush.bf16.msra.mxu0 %v754
        %816 = vmatpush.bf16.msra.mxu0 %v753
        %817 = vmatpush.bf16.msra.mxu0 %v752
        %818 = vmatpush.bf16.msra.mxu0 %v751
        %819 = vmatpush.bf16.msra.mxu0 %v750
        %820 = vmatpush.bf16.msra.mxu0 %v749
        %821 = vmatmul.bf16.gmra.mxu0 %v549
        %v822 = vpop.f32.mrf.mxu0
        %v823 = vadd.f32 %v619, %v822
        %v824 = vpop.f32.mrf.mxu0
        %825 = vdwg.mxu0
        %826 = vmatpush.bf16.msra.mxu0 %v764
        %827 = vmatpush.bf16.msra.mxu0 %v763
        %828 = vmatpush.bf16.msra.mxu0 %v762
        %829 = vmatpush.bf16.msra.mxu0 %v761
        %830 = vmatpush.bf16.msra.mxu0 %v760
        %831 = vmatpush.bf16.msra.mxu0 %v759
        %832 = vmatpush.bf16.msra.mxu0 %v758
        %833 = vmatpush.bf16.msra.mxu0 %v757
        %834 = vmatmul.bf16.gmra.mxu0 %v550
        %v835 = vpop.f32.mrf.mxu0
        %v836 = vadd.f32 %v823, %v835
        %v837 = vpop.f32.mrf.mxu0
        %838 = vdwg.mxu0
        %839 = vmatpush.bf16.msra.mxu0 %v772
        %840 = vmatpush.bf16.msra.mxu0 %v771
        %841 = vmatpush.bf16.msra.mxu0 %v770
        %842 = vmatpush.bf16.msra.mxu0 %v769
        %843 = vmatpush.bf16.msra.mxu0 %v768
        %844 = vmatpush.bf16.msra.mxu0 %v767
        %845 = vmatpush.bf16.msra.mxu0 %v766
        %846 = vmatpush.bf16.msra.mxu0 %v765
        %847 = vmatmul.bf16.gmra.mxu0 %v551
        %v848 = vpop.f32.mrf.mxu0
        %v849 = vadd.f32 %v836, %v848
        %v850 = vpop.f32.mrf.mxu0
        %851 = vdwg.mxu0
        %852 = vmatpush.bf16.msra.mxu0 %v780
        %853 = vmatpush.bf16.msra.mxu0 %v779
        %854 = vmatpush.bf16.msra.mxu0 %v778
        %855 = vmatpush.bf16.msra.mxu0 %v777
        %856 = vmatpush.bf16.msra.mxu0 %v776
        %857 = vmatpush.bf16.msra.mxu0 %v775
        %858 = vmatpush.bf16.msra.mxu0 %v774
        %859 = vmatpush.bf16.msra.mxu0 %v773
        %860 = vmatmul.bf16.gmra.mxu0 %v552
        %v861 = vpop.f32.mrf.mxu0
        %v862 = vadd.f32 %v849, %v861
        %v863 = vpop.f32.mrf.mxu0
        %864 = vdwg.mxu0
        %865 = vst [vmem:[%s289] sm:$0xff] %v862
        %s866 = sand.u32 %s142, 1
        %s867 = scalar_lea.sflag [#allocation4], %s866
        %s868 = sand.u32 %s142, 1
        %s869 = smul.addr %s868, 8
        %s870 = scalar_lea.vmem [#allocation10], %s869
        // Predicated region
        $region57: #{tpu_custom_call.1} parent=39 // pred_check
          %p871 = pneg %p152
        $region58: #{tpu_custom_call.1} parent=39 // pred_check_branch
          %873 = sbr.rel (%p871) target = $region60
        $region59: #{tpu_custom_call.1} parent=39 // pred_region
          %875 = vsyncadd %s867, 0
          %s876 = smul.addr %s24, 8
          %s877 = scalar_lea.hbm %s5, %s876
          %s879 = sshll.u32 %s870, 4
          %s880 = int_to_ptr.vmem [resolvable:$true] %s879
          %s881 = sshll.u32 %s877, 4
          %s882 = int_to_ptr.hbm [resolvable:$true] %s881
          %884 = dma.vmem_to_hbm [thread:$0]  %s880, 128, %s882, %s867
        $region60: #{tpu_custom_call.1} parent=39 // pred_fallthru
          _
      $region40: #{tpu_custom_call.1} parent=5 // pred_fallthru
        _
      %p885 = scmp.le.s32.totalorder 2, %s19
      // Predicated region
      $region61: #{tpu_custom_call.1} parent=5 // pred_check
        %p886 = pneg %p885
      $region62: #{tpu_custom_call.1} parent=5 // pred_check_branch
        %888 = sbr.rel (%p886) target = $region64
      $region63: #{tpu_custom_call.1} parent=5 // pred_region
        %s889 = ssub.s32 %s19, 2
        // Predicated region
        $region65: #{tpu_custom_call.1} parent=63 // pred_check
          %p890 = pneg %p158
        $region66: #{tpu_custom_call.1} parent=63 // pred_check_branch
          %892 = sbr.rel (%p890) target = $region68
        $region67: #{tpu_custom_call.1} parent=63 // pred_region
          %s893 = sand.u32 %s143, 1
          %s894 = scalar_lea.sflag [#allocation4], %s893
          %s895 = sand.u32 %s143, 1
          %s896 = smul.addr %s895, 8
          %s897 = scalar_lea.vmem [#allocation10], %s896
          %899 = dma.done %s894, 128
        $region68: #{tpu_custom_call.1} parent=63 // pred_fallthru
          _
      $region64: #{tpu_custom_call.1} parent=5 // pred_fallthru
        _
    $region6: #{tpu_custom_call.1} parent=1 // loop_footer
      %s23 = sadd.s32 1, %s19
    $region7: #{tpu_custom_call.1} parent=1 // loop_footer_branch
      %18 = sbr.rel target = $region3
    $region8: #{tpu_custom_call.1} parent=1 // loop_exit
      _
    %900 = vsyncpa [#allocation3], 1
    %s901 = scalar_lea.sflag [#allocation3], 1
    %902 = vsyncpa %s901, 1
    %903 = vsyncpa [#allocation6], 1
    %904 = vsyncpa [#allocation9], 1
    %905 = vsyncpa [#allocation4], 1
    %s906 = scalar_lea.sflag [#allocation4], 1
    %907 = vsyncpa %s906, 1

</llo_original>
